<compile_context>
chip_gen: v7x
topology: tpu7x:2x2x1
jax: 0.10.0
libtpu: 0.0.40
codegen_flags: <defaults>
</compile_context>

<pallas_src>
import jax
import jax.numpy as jnp
from jax.experimental import pallas as pl
from jax.experimental.pallas import tpu as pltpu


def _folded_mlp_kernel(x_ref, w_ref, b_ref, o_ref):
    """One batch tile of the folded network.

    x_ref : [TB, F] input rows (streamed, double-buffered by BlockSpec)
    w_ref : [F, 1]  folded weight column (VMEM-resident across the grid)
    b_ref : [1, 1]  folded bias (SMEM scalar)
    o_ref : [TB, 1] sigmoid output tile
    """
    # Natural MXU orientation: (TB,F) x (F,1) -> (TB,1); no transpose of the
    # streamed x tile. Accumulate in f32 regardless of the stream dtype.
    z = jnp.dot(x_ref[...], w_ref[...], preferred_element_type=jnp.float32)
    z = z + b_ref[0, 0]
    o_ref[...] = jax.nn.sigmoid(z)


def _round_up(x, m):
    return ((x + m - 1) // m) * m


def net_forward(x, params, *, tb_max=8192):
    """Forward pass of `Net`: sigmoid(fc3(fc2(fc1(x)))), fused in one kernel.

    `x` is streamed in whatever dtype it arrives (f32 or producer-supplied
    bf16); no wrapper-side casts of the activation stream are performed.
    """
    w1, b1, w2, b2, w3, b3 = params
    B, F = x.shape

    # Trace-time fold of the three Linear layers (valid: no inter-layer
    # nonlinearity). Fold in f32, then match the stream dtype for the weights.
    w_eff = (w1 @ w2) @ w3                    # [F, 1]
    b_eff = (b1 @ w2 + b2) @ w3 + b3          # [1, 1]
    w_col = w_eff.astype(x.dtype)             # tiny; cast is free
    b_eff = b_eff.astype(jnp.float32)

    # ---- Batch tiling (balanced, pad-free; last block may be ragged) -------
    n_tiles = pl.cdiv(B, tb_max)
    if n_tiles == 1 and B >= 512:
        n_tiles = 2                            # v7x: feed both TensorCores
    tb = _round_up(pl.cdiv(B, n_tiles), 128)
    if tb >= B:                                # single small tile: full-dim block
        tb = B
    grid = pl.cdiv(B, tb)                      # ragged last block, no jnp.pad copy

    # ---- VMEM budget: lane dim pads to 128 in VMEM, blocks double-buffered --
    lane = 128
    x_bytes = 2 * tb * lane * jnp.dtype(x.dtype).itemsize
    o_bytes = 2 * tb * lane * 4
    vmem_limit = int(min(max(x_bytes + o_bytes + (4 << 20), 16 << 20), 96 << 20))

    out = pl.pallas_call(
        _folded_mlp_kernel,
        out_shape=jax.ShapeDtypeStruct((B, 1), jnp.float32),
        grid_spec=pltpu.PrefetchScalarGridSpec(
            num_scalar_prefetch=0,
            grid=(grid,),
            in_specs=[
                pl.BlockSpec((tb, F), lambda i: (i, 0)),            # x: streamed
                pl.BlockSpec((F, 1), lambda i: (0, 0)),             # w_col: resident
                pl.BlockSpec(memory_space=pltpu.MemorySpace.SMEM),  # b_eff: scalar
            ],
            out_specs=pl.BlockSpec((tb, 1), lambda i: (i, 0)),
        ),
        compiler_params=pltpu.CompilerParams(
            dimension_semantics=("parallel",),   # batch axis over both TCs (v7x)
            vmem_limit_bytes=vmem_limit,
        ),
    )(x, w_col, b_eff)
    return out


def net_reference(x, params):
    """Plain-JAX reference of the original (unfolded) forward pass."""
    w1, b1, w2, b2, w3, b3 = params
    return jax.nn.sigmoid(((x @ w1 + b1) @ w2 + b2) @ w3 + b3)


def init_params(key, input_size):
    """Deterministic init mimicking nn.Linear's U(-1/sqrt(fan_in), ...).
    Weights stored as [in, out] (transposed vs. PyTorch's [out, in])."""
    def linear(key, fan_in, fan_out):
        kw, kb = jax.random.split(key)
        bound = 1.0 / jnp.sqrt(fan_in)
        w = jax.random.uniform(kw, (fan_in, fan_out), jnp.float32, -bound, bound)
        b = jax.random.uniform(kb, (1, fan_out), jnp.float32, -bound, bound)
        return w, b

    k1, k2, k3 = jax.random.split(key, 3)
    w1, b1 = linear(k1, input_size, 64)
    w2, b2 = linear(k2, 64, 32)
    w3, b3 = linear(k3, 32, 1)
    return (w1, b1, w2, b2, w3, b3)


if __name__ == "__main__":
    key = jax.random.PRNGKey(0)
    k_params, k_x1, k_x2 = jax.random.split(key, 3)

    input_size = 30  # breast-cancer dataset feature count

    params = init_params(k_params, input_size)

    # Case 1: tiny batch (single full-dim tile, grid=1).
    x_small = jax.random.normal(k_x1, (8, input_size), jnp.float32)
    out_small = jax.block_until_ready(net_forward(x_small, params))
    ref_small = net_reference(x_small, params)
    assert out_small.shape == (8, 1)
    assert bool(jnp.all((out_small > 0.0) & (out_small < 1.0)))
    assert bool(jnp.allclose(out_small, ref_small, atol=1e-4, rtol=1e-4))

    # Case 2: multi-tile batch with a ragged last block (grid=2, no jnp.pad,
    # exercises balanced tiles + parallel grid axis).
    x_big = jax.random.normal(k_x2, (1100, input_size), jnp.float32)
    out_big = jax.block_until_ready(net_forward(x_big, params))
    ref_big = net_reference(x_big, params)
    assert out_big.shape == (1100, 1)
    assert bool(jnp.allclose(out_big, ref_big, atol=1e-4, rtol=1e-4))

    # Case 3: producer-supplied bf16 activations (no wrapper cast inside
    # net_forward): kernel streams bf16, MXU accumulates in f32. Tolerance is
    # loose near the 0.5 decision boundary (documented serving path).
    x_bf16 = x_big.astype(jnp.bfloat16)
    out_bf16 = jax.block_until_ready(net_forward(x_bf16, params))
    assert out_bf16.shape == (1100, 1)
    assert bool(jnp.allclose(out_bf16, ref_big, atol=2e-2, rtol=0.0))

    print("KERNEL_OK")
</pallas_src>

<mosaic_0001>
module attributes {stable_mosaic.version = 11 : i64} {
  func.func @_folded_mlp_kernel(%arg0: i32, %arg1: memref<8x30xf32, #tpu.memory_space<vmem>>, %arg2: memref<30x1xf32, #tpu.memory_space<vmem>>, %arg3: memref<1x1xf32, #tpu.memory_space<smem>>, %arg4: memref<8x1xf32, #tpu.memory_space<vmem>>) attributes {dimension_semantics = [#tpu.dimension_semantics<parallel>], iteration_bounds = array<i64: 1>, scalar_prefetch = 0 : i64, scratch_operands = 0 : i64, tpu.core_type = #tpu.core_type<tc>, window_params = [{transform_indices = @transform_0, window_bounds = array<i64: 8, 30>}, {pipeline_mode = #tpu.pipeline_mode<synchronous>, transform_indices = @transform_1, window_bounds = array<i64: 30, 1>}, {transform_indices = @transform_2, window_bounds = array<i64: 1, 1>}, {transform_indices = @transform_3, window_bounds = array<i64: 8, 1>}]} {
    %c0 = arith.constant 0 : index
    %c0_0 = arith.constant 0 : index
    %0 = vector.load %arg1[%c0, %c0_0] : memref<8x30xf32, #tpu.memory_space<vmem>>, vector<8x30xf32>
    %c0_1 = arith.constant 0 : index
    %c0_2 = arith.constant 0 : index
    %1 = vector.load %arg2[%c0_1, %c0_2] : memref<30x1xf32, #tpu.memory_space<vmem>>, vector<30x1xf32>
    %cst = arith.constant dense<0.000000e+00> : vector<8x1xf32>
    %2 = tpu.matmul %0, %1, %cst {dimension_numbers = #tpu.dot_dimension_numbers<[1], [0], [0], [1], [0, 0, 1, 1], [], []>} : vector<8x30xf32>, vector<30x1xf32>, vector<8x1xf32> -> vector<8x1xf32>
    %c0_3 = arith.constant 0 : index
    %c0_4 = arith.constant 0 : index
    %3 = memref.load %arg3[%c0_3, %c0_4] : memref<1x1xf32, #tpu.memory_space<smem>>
    %4 = vector.broadcast %3 : f32 to vector<8x1xf32>
    %5 = arith.addf %2, %4 : vector<8x1xf32>
    %6 = arith.negf %5 : vector<8x1xf32>
    %7 = math.exp %6 : vector<8x1xf32>
    %cst_5 = arith.constant 1.000000e+00 : f32
    %8 = vector.broadcast %cst_5 : f32 to vector<8x1xf32>
    %9 = arith.addf %8, %7 : vector<8x1xf32>
    %10 = arith.divf %8, %9 : vector<8x1xf32>
    %c0_6 = arith.constant 0 : index
    %c0_7 = arith.constant 0 : index
    %11 = vector.load %arg4[%c0_6, %c0_7] : memref<8x1xf32, #tpu.memory_space<vmem>>, vector<8x1xf32>
    tpu.vector_store %arg4[%c0_6, %c0_7], %10 {strides = array<i32>} : memref<8x1xf32, #tpu.memory_space<vmem>>, vector<8x1xf32>,
    return
  }
  func.func @transform_0(%arg0: i32) -> (i32, i32) {
    %c0_i32 = arith.constant 0 : i32
    %c0_i32_0 = arith.constant 0 : i32
    return %arg0, %c0_i32 : i32, i32
  }
  func.func @transform_1(%arg0: i32) -> (i32, i32) {
    %c0_i32 = arith.constant 0 : i32
    %c0_i32_0 = arith.constant 0 : i32
    %c0_i32_1 = arith.constant 0 : i32
    return %c0_i32, %c0_i32_0 : i32, i32
  }
  func.func @transform_2(%arg0: i32) -> (i32, i32) {
    %c0_i32 = arith.constant 0 : i32
    %c0_i32_0 = arith.constant 0 : i32
    %c0_i32_1 = arith.constant 0 : i32
    return %c0_i32, %c0_i32_0 : i32, i32
  }
  func.func @transform_3(%arg0: i32) -> (i32, i32) {
    %c0_i32 = arith.constant 0 : i32
    %c0_i32_0 = arith.constant 0 : i32
    return %arg0, %c0_i32 : i32, i32
  }
}

</mosaic_0001>

<llo_original>
// kernel: tpu_custom_call.1
$region0: #{tpu_custom_call.1}
  #allocation0 [shape = 'u32[]', space=smem, size = 0x4, offset = 0x4, fixed_abs, tag = 'smem constant byte address 0x4 - core index']
  #allocation1 [shape = 'u32[144,128]{1,0:T(1,128)}', space=vmem, size = 0x12000, scoped, tag = 'internal scratch']
  #allocation2 [shape = 'f32[1,1]{1,0:T(1,128)S(6)}', space=smem, size = 0x200, scoped, tag = 'scoped memory for tpu_custom_call.1']
  %s0 = inlined_call_operand.vmem [shape: f32[8,30], index: 0, kind: input, shape index: {}]
  %s1 = inlined_call_operand.vmem [shape: f32[30,1], index: 1, kind: input, shape index: {}]
  %s2 = inlined_call_operand.<no memory space> [shape: f32[1,1], index: 2, kind: input, shape index: {}]
  %s3 = inlined_call_operand.vmem [shape: f32[8,1], index: 3, kind: output, shape index: {}]
  %s4 = sld [smem:[#allocation0]]
  $region22: #{tpu_custom_call.1} parent=0
    _
  %s6 = ssub.s32 1, %s4
  %s7 = scalar_select 0, %s6, %s4
  %8 = sst [smem:[#allocation2]] %s2
  // Predicated region
  $region2: #{tpu_custom_call.1} parent=0 // pred_check
    _
  $region3: #{tpu_custom_call.1} parent=0 // pred_check_branch
    %10 = sbr.rel (0) target = $region5
  $region4: #{tpu_custom_call.1} parent=0 // pred_region
    _
  $region5: #{tpu_custom_call.1} parent=0 // pred_fallthru
    _
  // Predicated region
  $region6: #{tpu_custom_call.1} parent=0 // pred_check
    _
  $region7: #{tpu_custom_call.1} parent=0 // pred_check_branch
    %12 = sbr.rel (0) target = $region9
  $region8: #{tpu_custom_call.1} parent=0 // pred_region
    _
  $region9: #{tpu_custom_call.1} parent=0 // pred_fallthru
    _
  // Predicated region
  $region10: #{tpu_custom_call.1} parent=0 // pred_check
    _
  $region11: #{tpu_custom_call.1} parent=0 // pred_check_branch
    %14 = sbr.rel (0) target = $region13
  $region12: #{tpu_custom_call.1} parent=0 // pred_region
    _
  $region13: #{tpu_custom_call.1} parent=0 // pred_fallthru
    _
  %v15 = vld [vmem:[%s0] sm:$0xff]
  %v16 = vld [vmem:[%s1] sm:$0xff]
  %v17 = vld [vmem:[%s1 + $0x8] sm:$0xff]
  %v18 = vld [vmem:[%s1 + $0x10] sm:$0xff]
  %v19 = vld [vmem:[%s1 + $0x18] sm:$0x3f]
  %s20 = sld [smem:[#allocation2]]
  %v21 = vstv %s20
  %vm22 = vcmask 244736
  %v24 = vsel %vm22, %v15, 0
  %vm26 = vcmask 1045504
  %v28 = vsel %vm26, %v19, 0
  %30 = vmatprep.subr.mxu0 0.0
  %31 = vmatpush1.msra.mxu0 %v16
  %32 = vmatprep.subr.mxu0 0.0
  %33 = vmatpush1.msra.mxu0 %v17
  %34 = vmatprep.subr.mxu0 0.0
  %35 = vmatpush1.msra.mxu0 %v18
  %36 = vmatprep.subr.mxu0 0.0
  %37 = vmatpush1.msra.mxu0 %v28
  %38 = vmatprep.subr.mxu0 0.0
  %39 = vmatpush1.msra.mxu0 0.0
  %40 = vmatprep.subr.mxu0 0.0
  %41 = vmatpush1.msra.mxu0 0.0
  %42 = vmatprep.subr.mxu0 0.0
  %43 = vmatpush1.msra.mxu0 0.0
  %44 = vmatprep.subr.mxu0 0.0
  %45 = vmatpush1.msra.mxu0 0.0
  %46 = vmatprep.subr.mxu0 0.0
  %47 = vmatpush1.msra.mxu0 0.0
  %48 = vmatprep.subr.mxu0 0.0
  %49 = vmatpush1.msra.mxu0 0.0
  %50 = vmatprep.subr.mxu0 0.0
  %51 = vmatpush1.msra.mxu0 0.0
  %52 = vmatprep.subr.mxu0 0.0
  %53 = vmatpush1.msra.mxu0 0.0
  %54 = vmatprep.subr.mxu0 0.0
  %55 = vmatpush1.msra.mxu0 0.0
  %56 = vmatprep.subr.mxu0 0.0
  %57 = vmatpush1.msra.mxu0 0.0
  %58 = vmatprep.subr.mxu0 0.0
  %59 = vmatpush1.msra.mxu0 0.0
  %60 = vmatprep.subr.mxu0 0.0
  %61 = vmatpush1.msra.mxu0 0.0
  %62 = vmatprep.subr.mxu0 0.0
  %63 = vmatpush1.msra.mxu0 0.0
  %64 = vmatprep.subr.mxu0 0.0
  %65 = vmatpush1.msra.mxu0 0.0
  %66 = vmatprep.subr.mxu0 0.0
  %67 = vmatpush1.msra.mxu0 0.0
  %68 = vmatprep.subr.mxu0 0.0
  %69 = vmatpush1.msra.mxu0 0.0
  %70 = vmatprep.subr.mxu0 0.0
  %71 = vmatpush1.msra.mxu0 0.0
  %72 = vmatprep.subr.mxu0 0.0
  %73 = vmatpush1.msra.mxu0 0.0
  %74 = vmatprep.subr.mxu0 0.0
  %75 = vmatpush1.msra.mxu0 0.0
  %76 = vmatprep.subr.mxu0 0.0
  %77 = vmatpush1.msra.mxu0 0.0
  %78 = vmatprep.subr.mxu0 0.0
  %79 = vmatpush1.msra.mxu0 0.0
  %80 = vmatprep.subr.mxu0 0.0
  %81 = vmatpush1.msra.mxu0 0.0
  %82 = vmatprep.subr.mxu0 0.0
  %83 = vmatpush1.msra.mxu0 0.0
  %84 = vmatprep.subr.mxu0 0.0
  %85 = vmatpush1.msra.mxu0 0.0
  %86 = vmatprep.subr.mxu0 0.0
  %87 = vmatpush1.msra.mxu0 0.0
  %88 = vmatprep.subr.mxu0 0.0
  %89 = vmatpush1.msra.mxu0 0.0
  %90 = vmatprep.subr.mxu0 0.0
  %91 = vmatpush1.msra.mxu0 0.0
  %92 = vmatprep.subr.mxu0 0.0
  %93 = vmatpush1.msra.mxu0 0.0
  %94 = vmatprep.mubr.f32.mxu0 0.0
  %95 = vmatmul.mubr.f32.gmra.mrb[0].mxu0 %v24
  %v96 = vpop.f32.mrb[0].mxu0
  %v97 = vadd.f32 %v21, %v96
  %v98 = vpop.f32.mrb[0].mxu0
  %99 = vdwg.mxu0
  %v100 = vxor.u32 %v97, 2147483648
  %v101 = vmul.f32 %v100, 1.442695
  %v102 = vpow.pop %v101
  %v103 = vadd.f32 %v102, 1.0
  %v104 = vrcp.pop %v103
  %v105 = vmul.f32 1.0, %v104
  %vm106 = vcmask 7168
  %107 = vst.msk [vmem:[%s3] sm:$0xff] %vm106, %v105
  // Predicated region
  $region14: #{tpu_custom_call.1} parent=0 // pred_check
    _
  $region15: #{tpu_custom_call.1} parent=0 // pred_check_branch
    %109 = sbr.rel (0) target = $region17
  $region16: #{tpu_custom_call.1} parent=0 // pred_region
    _
  $region17: #{tpu_custom_call.1} parent=0 // pred_fallthru
    _
  // Predicated region
  $region18: #{tpu_custom_call.1} parent=0 // pred_check
    _
  $region19: #{tpu_custom_call.1} parent=0 // pred_check_branch
    %111 = sbr.rel (0) target = $region21
  $region20: #{tpu_custom_call.1} parent=0 // pred_region
    _
  $region21: #{tpu_custom_call.1} parent=0 // pred_fallthru
    _

</llo_original>
